<compile_context>
chip_gen: v7x
topology: tpu7x:2x2x1
jax: 0.10.0
libtpu: 0.0.40
codegen_flags: <defaults>
</compile_context>

<pallas_src>
import functools

import numpy as np
import jax
import jax.numpy as jnp
from jax.experimental import pallas as pl
from jax.experimental.pallas import tpu as pltpu


# ------------------------------- helpers ------------------------------------

def _round_up(x, m):
    return ((x + m - 1) // m) * m


def _apply_activation(x, activation):
    if activation == "silu":
        return x * jax.nn.sigmoid(x)
    if activation == "relu":
        return jnp.maximum(x, 0.0)
    if activation == "gelu":
        return jax.nn.gelu(x)
    if activation in (None, "identity", "linear"):
        return x
    raise ValueError(f"unsupported activation: {activation}")


# ----------------------------- Pallas kernel --------------------------------

def _ae_fused_kernel(kn_ref, v_ref, wdn_ref, wdv_ref, wup_ref, out_ref, *,
                     activation):
    """One (tm, N_pad) row tile of  out = act([k_nope | v] @ W_down) @ W_up.

    W_down (split into nope / value halves) and W_up are VMEM-resident; the
    low-rank bottleneck `c` never touches HBM; the store is lane-dense.
    """
    wdt = wdn_ref.dtype
    # Down-projection over both K segments, f32 accumulation on the MXU.
    c = jnp.dot(kn_ref[...].astype(wdt), wdn_ref[...],
                preferred_element_type=jnp.float32)
    c = c + jnp.dot(v_ref[...].astype(wdt), wdv_ref[...],
                    preferred_element_type=jnp.float32)
    c = _apply_activation(c, activation)                       # f32 (tm, R_pad)
    # Up-projection; zero-padded W_up rows/cols make the padding inert.
    out = jnp.dot(c.astype(wup_ref.dtype), wup_ref[...],
                  preferred_element_type=jnp.float32)           # (tm, N_pad)
    out_ref[...] = out.astype(out_ref.dtype)                    # lane-dense store


def ae_fused_forward(k_nope2d, value2d, w_down, w_up, *, activation="silu",
                     compute_dtype=jnp.bfloat16, out_dtype=None,
                     tm_target=512, vmem_budget_bytes=40 << 20):
    """act(concat([k_nope, v], -1) @ w_down) @ w_up  as one Pallas kernel.

    k_nope2d: (M, n_nope), value2d: (M, kvd),
    w_down: (n_nope + kvd, R), w_up: (R, n_nope + kvd).
    Returns (M, n_nope + kvd) in `out_dtype`.
    """
    M, n_nope = k_nope2d.shape
    M2, kvd = value2d.shape
    assert M == M2 and n_nope > 0 and kvd > 0
    K, R = w_down.shape
    R2, N = w_up.shape
    assert K == n_nope + kvd and R == R2 and N == n_nope + kvd
    out_dtype = out_dtype if out_dtype is not None else k_nope2d.dtype

    # ---- lane-dense zero-padding of the (tiny) weights only ----------------
    R_pad = _round_up(R, 128)
    N_pad = _round_up(N, 128)
    w_down_c = w_down.astype(compute_dtype)
    w_dn = jnp.zeros((n_nope, R_pad), compute_dtype).at[:, :R].set(
        w_down_c[:n_nope, :])
    w_dv = jnp.zeros((kvd, R_pad), compute_dtype).at[:, :R].set(
        w_down_c[n_nope:, :])
    w_up_p = jnp.zeros((R_pad, N_pad), compute_dtype).at[:R, :N].set(
        w_up.astype(compute_dtype))

    # ---- row tiling: big tiles, VMEM-budget aware, >=2 m-tiles for v7x -----
    act_bytes = jnp.dtype(k_nope2d.dtype).itemsize
    out_bytes = jnp.dtype(out_dtype).itemsize
    w_bytes = 2 * 2 * (K * R_pad + R_pad * N_pad)          # double-buffered weights
    row_bytes = (2 * (n_nope + kvd) * act_bytes            # double-buffered inputs
                 + 2 * N_pad * out_bytes                   # double-buffered output
                 + 4 * (R_pad + N_pad))                    # f32 c / out staging
    M_pad = _round_up(M, 8)
    tm = max(8, min(tm_target, M_pad))
    tm = (tm // 8) * 8
    while tm > 8 and w_bytes + tm * row_bytes > vmem_budget_bytes:
        tm = max(8, ((tm // 2) // 8) * 8)
    num_tiles = pl.cdiv(M_pad, tm)
    if num_tiles == 1 and M_pad >= 16:
        num_tiles = 2                      # keep both v7x TensorCores busy
    tm = _round_up(pl.cdiv(M_pad, num_tiles), 8)
    num_tiles = pl.cdiv(M_pad, tm)
    M_pad = num_tiles * tm

    def pad_rows(x):
        if x.shape[0] == M_pad:
            return x
        # Padded rows are zeros; their outputs are sliced off below.
        return jnp.pad(x, ((0, M_pad - x.shape[0]), (0, 0)))

    kn_p = pad_rows(k_nope2d)
    v_p = pad_rows(value2d)

    flops = int(2 * M_pad * K * R_pad + 2 * M_pad * R_pad * N_pad)
    bytes_accessed = int((kn_p.size + v_p.size) * act_bytes
                         + (w_dn.size + w_dv.size + w_up_p.size) * 2
                         + M_pad * N_pad * out_bytes)
    vmem_limit = int(min(max(1.2 * (w_bytes + tm * row_bytes), 32 << 20),
                         60 << 20))

    out = pl.pallas_call(
        functools.partial(_ae_fused_kernel, activation=activation),
        out_shape=jax.ShapeDtypeStruct((M_pad, N_pad), out_dtype),
        grid_spec=pltpu.PrefetchScalarGridSpec(
            num_scalar_prefetch=0,
            grid=(num_tiles,),
            in_specs=[
                pl.BlockSpec((tm, n_nope), lambda m: (m, 0)),      # k_nope rows
                pl.BlockSpec((tm, kvd), lambda m: (m, 0)),         # value rows
                pl.BlockSpec((n_nope, R_pad), lambda m: (0, 0)),   # W_down (nope), resident
                pl.BlockSpec((kvd, R_pad), lambda m: (0, 0)),      # W_down (value), resident
                pl.BlockSpec((R_pad, N_pad), lambda m: (0, 0)),    # W_up, resident
            ],
            out_specs=pl.BlockSpec((tm, N_pad), lambda m: (m, 0)),
        ),
        compiler_params=pltpu.CompilerParams(
            dimension_semantics=("parallel",),
            vmem_limit_bytes=vmem_limit),
        cost_estimate=pl.CostEstimate(
            flops=flops, transcendentals=int(M_pad * R_pad),
            bytes_accessed=bytes_accessed),
    )(kn_p, v_p, w_dn, w_dv, w_up_p)
    return out[:M, :N]


# ------------------------- AutoEncoderV2 forward ----------------------------

def auto_encoder_v2_forward(params, k_r, k_nope, value_states, *, nope_mask,
                            num_key_value_heads, head_dim,
                            activation_fn="silu", compute_dtype=jnp.bfloat16):
    """JAX/Pallas equivalent of AutoEncoderV2.forward (past_key_value=None).

    params["W_down_k"]: (n_nope + kvh*D, low_rank*kvh)  (= torch weight.T)
    params["W_up_k"]  : (low_rank*kvh, n_nope + kvh*D)  (= torch weight.T)
    Returns (key_states, value_states), each (B, S, kvh*D).
    """
    B, S, n_nope_in = k_nope.shape
    nope_mask = np.asarray(nope_mask, dtype=bool)
    kvd = num_key_value_heads * head_dim
    n_nope = int(nope_mask.sum())
    assert nope_mask.shape[-1] == kvd and n_nope == n_nope_in

    # TODO(synk): past_key_value / Cache.update branch (KV-cache concat along
    # the sequence axis) is not implemented; this covers past_key_value=None.

    up = ae_fused_forward(
        k_nope.reshape(B * S, n_nope),
        value_states.reshape(B * S, kvd),
        params["W_down_k"], params["W_up_k"],
        activation=activation_fn,
        compute_dtype=compute_dtype,
        out_dtype=k_nope.dtype,
    ).reshape(B, S, n_nope + kvd)

    k_c = up[..., :n_nope]
    value_states_out = up[..., n_nope:]

    # key_states[..., nope_mask] = k_c ; key_states[..., ~nope_mask] = k_r
    # Pure static layout op — no dynamic scatter.
    mask2 = nope_mask.reshape(num_key_value_heads, head_dim)
    rope_per_head = int((~mask2[0]).sum())
    structured = all(
        np.array_equal(
            row,
            np.concatenate([np.zeros(rope_per_head, bool),
                            np.ones(head_dim - rope_per_head, bool)]))
        for row in mask2)
    if structured:
        nope_per_head = head_dim - rope_per_head
        key_states = jnp.concatenate(
            [k_r.reshape(B, S, num_key_value_heads, rope_per_head),
             k_c.reshape(B, S, num_key_value_heads, nope_per_head)],
            axis=-1).reshape(B, S, kvd)
    else:
        # General mask: single static-permutation gather over the last axis.
        n_rope = kvd - n_nope
        perm = np.zeros(kvd, dtype=np.int32)
        perm[nope_mask] = np.arange(n_nope)
        perm[~nope_mask] = n_nope + np.arange(n_rope)
        key_states = jnp.take(jnp.concatenate([k_c, k_r], axis=-1),
                              jnp.asarray(perm), axis=-1)

    return key_states, value_states_out


# ----------------------------------- main ------------------------------------

if __name__ == "__main__":
    # Small synthetic LlamaConfig-like setup.
    num_key_value_heads = 2
    head_dim = 16
    low_rank = 8
    batch, seq = 2, 8
    kvd = num_key_value_heads * head_dim                     # 32
    activation_fn = "silu"

    # nope_mask: per kv head, first half of head_dim uses RoPE (False),
    # second half is "nope" (True). Shape (kvh * head_dim,)
    per_head = np.concatenate([np.zeros(head_dim // 2, bool),
                               np.ones(head_dim // 2, bool)])
    nope_mask = np.tile(per_head, num_key_value_heads)       # (32,)
    n_nope = int(nope_mask.sum())                            # 16
    n_rope = kvd - n_nope                                    # 16
    r_total = low_rank * num_key_value_heads                 # 16

    root = jax.random.PRNGKey(0)
    k1, k2, k3, k4, k5 = jax.random.split(root, 5)
    k_r = jax.random.normal(k1, (batch, seq, n_rope), jnp.float32)
    k_nope = jax.random.normal(k2, (batch, seq, n_nope), jnp.float32)
    value_states = jax.random.normal(k3, (batch, seq, kvd), jnp.float32)
    params = {
        "W_down_k": jax.random.normal(k4, (n_nope + kvd, r_total), jnp.float32) * 0.05,
        "W_up_k": jax.random.normal(k5, (r_total, n_nope + kvd), jnp.float32) * 0.05,
    }

    key_states, value_out = auto_encoder_v2_forward(
        params, k_r, k_nope, value_states,
        nope_mask=nope_mask,
        num_key_value_heads=num_key_value_heads,
        head_dim=head_dim,
        activation_fn=activation_fn,
        compute_dtype=jnp.bfloat16)
    key_states = jax.block_until_ready(key_states)
    value_out = jax.block_until_ready(value_out)

    # ---- pure-JAX f32 reference (matches the PyTorch module) ----------------
    kv_ref = jnp.concatenate([k_nope, value_states], axis=-1)
    c_ref = kv_ref @ params["W_down_k"]
    c_ref = c_ref * jax.nn.sigmoid(c_ref)
    up_ref = c_ref @ params["W_up_k"]
    k_c_ref, v_ref = up_ref[..., :n_nope], up_ref[..., n_nope:]
    key_ref = jnp.zeros((batch, seq, kvd), jnp.float32)
    key_ref = key_ref.at[..., np.nonzero(nope_mask)[0]].set(k_c_ref)
    key_ref = key_ref.at[..., np.nonzero(~nope_mask)[0]].set(k_r)

    assert key_states.shape == (batch, seq, kvd)
    assert value_out.shape == (batch, seq, kvd)
    assert bool(jnp.all(jnp.isfinite(key_states)))
    assert bool(jnp.all(jnp.isfinite(value_out)))
    np.testing.assert_allclose(np.asarray(key_states), np.asarray(key_ref),
                               atol=2e-2, rtol=2e-2)
    np.testing.assert_allclose(np.asarray(value_out), np.asarray(v_ref),
                               atol=2e-2, rtol=2e-2)
    print("KERNEL_OK")
</pallas_src>

<mosaic_0001>
module attributes {stable_mosaic.version = 11 : i64} {
  func.func @_ae_fused_kernel(%arg0: i32, %arg1: memref<8x16xf32, #tpu.memory_space<vmem>>, %arg2: memref<8x32xf32, #tpu.memory_space<vmem>>, %arg3: memref<16x128xbf16, #tpu.memory_space<vmem>>, %arg4: memref<32x128xbf16, #tpu.memory_space<vmem>>, %arg5: memref<128x128xbf16, #tpu.memory_space<vmem>>, %arg6: memref<8x128xf32, #tpu.memory_space<vmem>>) attributes {dimension_semantics = [#tpu.dimension_semantics<parallel>], iteration_bounds = array<i64: 2>, scalar_prefetch = 0 : i64, scratch_operands = 0 : i64, tpu.core_type = #tpu.core_type<tc>, window_params = [{transform_indices = @transform_0, window_bounds = array<i64: 8, 16>}, {transform_indices = @transform_1, window_bounds = array<i64: 8, 32>}, {pipeline_mode = #tpu.pipeline_mode<synchronous>, transform_indices = @transform_2, window_bounds = array<i64: 16, 128>}, {pipeline_mode = #tpu.pipeline_mode<synchronous>, transform_indices = @transform_3, window_bounds = array<i64: 32, 128>}, {pipeline_mode = #tpu.pipeline_mode<synchronous>, transform_indices = @transform_4, window_bounds = array<i64: 128, 128>}, {transform_indices = @transform_5, window_bounds = array<i64: 8, 128>}]} {
    %c0 = arith.constant 0 : index
    %c0_0 = arith.constant 0 : index
    %0 = vector.load %arg1[%c0, %c0_0] : memref<8x16xf32, #tpu.memory_space<vmem>>, vector<8x16xf32>
    %1 = arith.truncf %0 : vector<8x16xf32> to vector<8x16xbf16>
    %c0_1 = arith.constant 0 : index
    %c0_2 = arith.constant 0 : index
    %2 = vector.load %arg3[%c0_1, %c0_2] : memref<16x128xbf16, #tpu.memory_space<vmem>>, vector<16x128xbf16>
    %cst = arith.constant dense<0.000000e+00> : vector<8x128xf32>
    %3 = tpu.matmul %1, %2, %cst {dimension_numbers = #tpu.dot_dimension_numbers<[1], [0], [0], [1], [0, 0, 1, 1], [], []>} : vector<8x16xbf16>, vector<16x128xbf16>, vector<8x128xf32> -> vector<8x128xf32>
    %c0_3 = arith.constant 0 : index
    %c0_4 = arith.constant 0 : index
    %4 = vector.load %arg2[%c0_3, %c0_4] : memref<8x32xf32, #tpu.memory_space<vmem>>, vector<8x32xf32>
    %5 = arith.truncf %4 : vector<8x32xf32> to vector<8x32xbf16>
    %c0_5 = arith.constant 0 : index
    %c0_6 = arith.constant 0 : index
    %6 = vector.load %arg4[%c0_5, %c0_6] : memref<32x128xbf16, #tpu.memory_space<vmem>>, vector<32x128xbf16>
    %cst_7 = arith.constant dense<0.000000e+00> : vector<8x128xf32>
    %7 = tpu.matmul %5, %6, %cst_7 {dimension_numbers = #tpu.dot_dimension_numbers<[1], [0], [0], [1], [0, 0, 1, 1], [], []>} : vector<8x32xbf16>, vector<32x128xbf16>, vector<8x128xf32> -> vector<8x128xf32>
    %8 = arith.addf %3, %7 : vector<8x128xf32>
    %9 = arith.negf %8 : vector<8x128xf32>
    %10 = math.exp %9 : vector<8x128xf32>
    %cst_8 = arith.constant 1.000000e+00 : f32
    %11 = vector.broadcast %cst_8 : f32 to vector<8x128xf32>
    %12 = arith.addf %11, %10 : vector<8x128xf32>
    %13 = arith.divf %11, %12 : vector<8x128xf32>
    %14 = arith.mulf %8, %13 : vector<8x128xf32>
    %15 = arith.truncf %14 : vector<8x128xf32> to vector<8x128xbf16>
    %c0_9 = arith.constant 0 : index
    %c0_10 = arith.constant 0 : index
    %16 = vector.load %arg5[%c0_9, %c0_10] : memref<128x128xbf16, #tpu.memory_space<vmem>>, vector<128x128xbf16>
    %cst_11 = arith.constant dense<0.000000e+00> : vector<8x128xf32>
    %17 = tpu.matmul %15, %16, %cst_11 {dimension_numbers = #tpu.dot_dimension_numbers<[1], [0], [0], [1], [0, 0, 1, 1], [], []>} : vector<8x128xbf16>, vector<128x128xbf16>, vector<8x128xf32> -> vector<8x128xf32>
    %c0_12 = arith.constant 0 : index
    %c0_13 = arith.constant 0 : index
    %18 = vector.load %arg6[%c0_12, %c0_13] : memref<8x128xf32, #tpu.memory_space<vmem>>, vector<8x128xf32>
    tpu.vector_store %arg6[%c0_12, %c0_13], %17 {strides = array<i32>} : memref<8x128xf32, #tpu.memory_space<vmem>>, vector<8x128xf32>,
    return
  }
  func.func @transform_0(%arg0: i32) -> (i32, i32) {
    %c0_i32 = arith.constant 0 : i32
    %c0_i32_0 = arith.constant 0 : i32
    return %arg0, %c0_i32 : i32, i32
  }
  func.func @transform_1(%arg0: i32) -> (i32, i32) {
    %c0_i32 = arith.constant 0 : i32
    %c0_i32_0 = arith.constant 0 : i32
    return %arg0, %c0_i32 : i32, i32
  }
  func.func @transform_2(%arg0: i32) -> (i32, i32) {
    %c0_i32 = arith.constant 0 : i32
    %c0_i32_0 = arith.constant 0 : i32
    %c0_i32_1 = arith.constant 0 : i32
    return %c0_i32, %c0_i32_0 : i32, i32
  }
  func.func @transform_3(%arg0: i32) -> (i32, i32) {
    %c0_i32 = arith.constant 0 : i32
    %c0_i32_0 = arith.constant 0 : i32
    %c0_i32_1 = arith.constant 0 : i32
    return %c0_i32, %c0_i32_0 : i32, i32
  }
  func.func @transform_4(%arg0: i32) -> (i32, i32) {
    %c0_i32 = arith.constant 0 : i32
    %c0_i32_0 = arith.constant 0 : i32
    %c0_i32_1 = arith.constant 0 : i32
    return %c0_i32, %c0_i32_0 : i32, i32
  }
  func.func @transform_5(%arg0: i32) -> (i32, i32) {
    %c0_i32 = arith.constant 0 : i32
    %c0_i32_0 = arith.constant 0 : i32
    return %arg0, %c0_i32 : i32, i32
  }
}

</mosaic_0001>

<llo_original>
// kernel: tpu_custom_call.1
$region0: #{tpu_custom_call.1}
  #allocation0 [shape = 'u32[]', space=smem, size = 0x4, offset = 0x4, fixed_abs, tag = 'smem constant byte address 0x4 - core index']
  #allocation1 [shape = 'u32[144,128]{1,0:T(1,128)}', space=vmem, size = 0x12000, scoped, tag = 'internal scratch']
  %s0 = inlined_call_operand.hbm [shape: f32[16,16], index: 0, kind: input, shape index: {}]
  %s1 = inlined_call_operand.hbm [shape: f32[16,32], index: 1, kind: input, shape index: {}]
  %s2 = inlined_call_operand.hbm [shape: bf16[16,128], index: 2, kind: input, shape index: {}]
  %s3 = inlined_call_operand.hbm [shape: bf16[32,128], index: 3, kind: input, shape index: {}]
  %s4 = inlined_call_operand.hbm [shape: bf16[128,128], index: 4, kind: input, shape index: {}]
  %s5 = inlined_call_operand.hbm [shape: f32[16,128], index: 5, kind: output, shape index: {}]
  %s6 = sld [smem:[#allocation0]]
  $region73: #{tpu_custom_call.1} parent=0
    _
  %s8 = ssub.s32 1, %s6
  %s9 = scalar_select 0, %s8, %s6
  $region1: #{tpu_custom_call.1} parent=0
    #allocation2 [shape = 'u8[8192]{0}', space=vmem, size = 0x2000, scoped, tag = 'input window, operand 0']
    #allocation3 [shape = 's32[2]{0}', space=sflag, size = 0x8, scoped, tag = 'scoped memory for tpu_custom_call.1']
    #allocation4 [shape = 's32[2]{0}', space=sflag, size = 0x8, scoped, tag = 'scoped memory for tpu_custom_call.1']
    #allocation5 [shape = 'u8[8192]{0}', space=vmem, size = 0x2000, scoped, tag = 'input window, operand 1']
    #allocation6 [shape = 's32[2]{0}', space=sflag, size = 0x8, scoped, tag = 'scoped memory for tpu_custom_call.1']
    #allocation7 [shape = 'u8[4096]{0}', space=vmem, size = 0x1000, scoped, tag = 'input window, operand 2, single buffered']
    #allocation8 [shape = 'u8[8192]{0}', space=vmem, size = 0x2000, scoped, tag = 'input window, operand 3, single buffered']
    #allocation9 [shape = 's32[1]{0}', space=sflag, size = 0x4, scoped, tag = 'scoped memory for tpu_custom_call.1']
    #allocation10 [shape = 'u8[32768]{0}', space=vmem, size = 0x8000, scoped, tag = 'input window, operand 4, single buffered']
    #allocation11 [shape = 'u8[8192]{0}', space=vmem, size = 0x2000, scoped, tag = 'output window, operand 0']
    %10 = vsyncpa [#allocation3], 0
    %s11 = scalar_lea.sflag [#allocation3], 1
    %12 = vsyncpa %s11, 0
    %13 = vsyncpa [#allocation6], 0
    %s14 = scalar_lea.sflag [#allocation6], 1
    %15 = vsyncpa %s14, 0
    %16 = vsyncpa [#allocation9], 0
    %17 = vsyncpa [#allocation4], 0
    %s18 = scalar_lea.sflag [#allocation4], 1
    %19 = vsyncpa %s18, 0
    loop: start=0, step=1, limit=4
    $region2: #{tpu_custom_call.1} parent=1 // loop_pre_header
      _
    $region3: #{tpu_custom_call.1} parent=1 // loop_header
      %s21 = sphi 0, %s25
      %p22 = scmp.ge.s32.totalorder %s21, 4
      %s31 = sphi 0, %s33
      %s34 = sphi 0, %s31
      %s35 = sphi 0, %s34
      %s51 = sphi 0, %s35
      %s57 = sphi 0, %s59
      %s60 = sphi 0, %s57
      %s61 = sphi 0, %s60
      %s77 = sphi 0, %s61
      %s81 = sphi 0, %s81
      %s83 = sphi 0, %s81
      %s84 = sphi 0, %s83
      %s98 = sphi 0, %s84
      %s102 = sphi 0, %s102
      %s104 = sphi 0, %s102
      %s105 = sphi 0, %s104
      %s119 = sphi 0, %s105
      %s123 = sphi 0, %s123
      %s125 = sphi 0, %s123
      %s126 = sphi 0, %s125
      %s140 = sphi 0, %s126
      %s146 = sphi 0, %s148
      %s149 = sphi 0, %s146
      %s150 = sphi 0, %s149
      %s166 = sphi 0, %s150
    $region4: #{tpu_custom_call.1} parent=1 // loop_header_branch
      %24 = sbr.rel (%p22) target = $region8
    $region5: #{tpu_custom_call.1} parent=1 // loop_body
      %s26 = ssub.s32 %s21, 1
      %s27 = ssub.s32 %s21, 2
      %s28 = sadd.s32 %s21, 1
      %s29 = ssub.s32 %s21, %s28
      %p30 = scmp.eq.s32.totalorder %s29, 0
      %s32 = sadd.s32 %s31, 1
      %s33 = scalar_select %p30, %s31, %s32
      %p36 = pneg %p30
      %p37 = scmp.eq.s32.totalorder %s21, 1
      %p38 = por %p36, %p37
      %p39 = scmp.ne.s32.totalorder %s31, %s34
      %p40 = scmp.eq.s32.totalorder %s21, 0
      %p41 = por %p39, %p40
      %p42 = scmp.ne.s32.totalorder %s31, %s34
      %p43 = scmp.eq.s32.totalorder %s26, 1
      %p44 = por %p42, %p43
      %p45 = scmp.ne.s32.totalorder %s34, %s35
      %p46 = scmp.eq.s32.totalorder %s26, 0
      %p47 = por %p45, %p46
      %p48 = scmp.ne.s32.totalorder %s34, %s35
      %p49 = scmp.eq.s32.totalorder %s27, 1
      %p50 = por %p48, %p49
      %p52 = scmp.ne.s32.totalorder %s35, %s51
      %p53 = scmp.eq.s32.totalorder %s27, 0
      %p54 = por %p52, %p53
      %s55 = ssub.s32 %s21, %s28
      %p56 = scmp.eq.s32.totalorder %s55, 0
      %s58 = sadd.s32 %s57, 1
      %s59 = scalar_select %p56, %s57, %s58
      %p62 = pneg %p56
      %p63 = scmp.eq.s32.totalorder %s21, 1
      %p64 = por %p62, %p63
      %p65 = scmp.ne.s32.totalorder %s57, %s60
      %p66 = scmp.eq.s32.totalorder %s21, 0
      %p67 = por %p65, %p66
      %p68 = scmp.ne.s32.totalorder %s57, %s60
      %p69 = scmp.eq.s32.totalorder %s26, 1
      %p70 = por %p68, %p69
      %p71 = scmp.ne.s32.totalorder %s60, %s61
      %p72 = scmp.eq.s32.totalorder %s26, 0
      %p73 = por %p71, %p72
      %p74 = scmp.ne.s32.totalorder %s60, %s61
      %p75 = scmp.eq.s32.totalorder %s27, 1
      %p76 = por %p74, %p75
      %p78 = scmp.ne.s32.totalorder %s61, %s77
      %p79 = scmp.eq.s32.totalorder %s27, 0
      %p80 = por %p78, %p79
      %s82 = sadd.s32 %s81, 1
      %p85 = scmp.eq.s32.totalorder %s21, 1
      %p86 = scmp.ne.s32.totalorder %s81, %s83
      %p87 = scmp.eq.s32.totalorder %s21, 0
      %p88 = por %p86, %p87
      %p89 = scmp.ne.s32.totalorder %s81, %s83
      %p90 = scmp.eq.s32.totalorder %s26, 1
      %p91 = por %p89, %p90
      %p92 = scmp.ne.s32.totalorder %s83, %s84
      %p93 = scmp.eq.s32.totalorder %s26, 0
      %p94 = por %p92, %p93
      %p95 = scmp.ne.s32.totalorder %s83, %s84
      %p96 = scmp.eq.s32.totalorder %s27, 1
      %p97 = por %p95, %p96
      %p99 = scmp.ne.s32.totalorder %s84, %s98
      %p100 = scmp.eq.s32.totalorder %s27, 0
      %p101 = por %p99, %p100
      %s103 = sadd.s32 %s102, 1
      %p106 = scmp.eq.s32.totalorder %s21, 1
      %p107 = scmp.ne.s32.totalorder %s102, %s104
      %p108 = scmp.eq.s32.totalorder %s21, 0
      %p109 = por %p107, %p108
      %p110 = scmp.ne.s32.totalorder %s102, %s104
      %p111 = scmp.eq.s32.totalorder %s26, 1
      %p112 = por %p110, %p111
      %p113 = scmp.ne.s32.totalorder %s104, %s105
      %p114 = scmp.eq.s32.totalorder %s26, 0
      %p115 = por %p113, %p114
      %p116 = scmp.ne.s32.totalorder %s104, %s105
      %p117 = scmp.eq.s32.totalorder %s27, 1
      %p118 = por %p116, %p117
      %p120 = scmp.ne.s32.totalorder %s105, %s119
      %p121 = scmp.eq.s32.totalorder %s27, 0
      %p122 = por %p120, %p121
      %s124 = sadd.s32 %s123, 1
      %p127 = scmp.eq.s32.totalorder %s21, 1
      %p128 = scmp.ne.s32.totalorder %s123, %s125
      %p129 = scmp.eq.s32.totalorder %s21, 0
      %p130 = por %p128, %p129
      %p131 = scmp.ne.s32.totalorder %s123, %s125
      %p132 = scmp.eq.s32.totalorder %s26, 1
      %p133 = por %p131, %p132
      %p134 = scmp.ne.s32.totalorder %s125, %s126
      %p135 = scmp.eq.s32.totalorder %s26, 0
      %p136 = por %p134, %p135
      %p137 = scmp.ne.s32.totalorder %s125, %s126
      %p138 = scmp.eq.s32.totalorder %s27, 1
      %p139 = por %p137, %p138
      %p141 = scmp.ne.s32.totalorder %s126, %s140
      %p142 = scmp.eq.s32.totalorder %s27, 0
      %p143 = por %p141, %p142
      %s144 = ssub.s32 %s21, %s28
      %p145 = scmp.eq.s32.totalorder %s144, 0
      %s147 = sadd.s32 %s146, 1
      %s148 = scalar_select %p145, %s146, %s147
      %p151 = pneg %p145
      %p152 = scmp.eq.s32.totalorder %s21, 1
      %p153 = por %p151, %p152
      %p154 = scmp.ne.s32.totalorder %s146, %s149
      %p155 = scmp.eq.s32.totalorder %s21, 0
      %p156 = por %p154, %p155
      %p157 = scmp.ne.s32.totalorder %s146, %s149
      %p158 = scmp.eq.s32.totalorder %s26, 1
      %p159 = por %p157, %p158
      %p160 = scmp.ne.s32.totalorder %s149, %s150
      %p161 = scmp.eq.s32.totalorder %s26, 0
      %p162 = por %p160, %p161
      %p163 = scmp.ne.s32.totalorder %s149, %s150
      %p164 = scmp.eq.s32.totalorder %s27, 1
      %p165 = por %p163, %p164
      %p167 = scmp.ne.s32.totalorder %s150, %s166
      %p168 = scmp.eq.s32.totalorder %s27, 0
      %p169 = por %p167, %p168
      %p170 = scmp.le.s32.totalorder 1, %s21
      %p171 = scmp.lt.s32.totalorder %s21, 3
      %p172 = pnand %p170, %p171
      %p173 = pneg %p172
      // Predicated region
      $region9: #{tpu_custom_call.1} parent=5 // pred_check
        _
      $region10: #{tpu_custom_call.1} parent=5 // pred_check_branch
        %175 = sbr.rel (%p172) target = $region12
      $region11: #{tpu_custom_call.1} parent=5 // pred_region
        %s176 = ssub.s32 %s21, 1
        // Predicated region
        $region13: #{tpu_custom_call.1} parent=11 // pred_check
          %p177 = pneg %p94
        $region14: #{tpu_custom_call.1} parent=11 // pred_check_branch
          %179 = sbr.rel (%p177) target = $region16
        $region15: #{tpu_custom_call.1} parent=11 // pred_region
          %s181 = ssub.s32 128, 128
          %182 = vsyncadd [#allocation6], %s181
          %s183 = sshll.u32 [#allocation7], 4
          %s184 = int_to_ptr.vmem [resolvable:$true] %s183
          %189 = dma.hbm_to_vmem [thread:$0]  %s2, 128, %s184, [#allocation6], 64, 64, 4
        $region16: #{tpu_custom_call.1} parent=11 // pred_fallthru
          _
        // Predicated region
        $region17: #{tpu_custom_call.1} parent=11 // pred_check
          %p190 = pneg %p115
        $region18: #{tpu_custom_call.1} parent=11 // pred_check_branch
          %192 = sbr.rel (%p190) target = $region20
        $region19: #{tpu_custom_call.1} parent=11 // pred_region
          %s194 = ssub.s32 256, 256
          %195 = vsyncadd [#allocation9], %s194
          %s196 = sshll.u32 [#allocation8], 4
          %s197 = int_to_ptr.vmem [resolvable:$true] %s196
          %202 = dma.hbm_to_vmem [thread:$0]  %s3, 256, %s197, [#allocation9], 64, 64, 4
        $region20: #{tpu_custom_call.1} parent=11 // pred_fallthru
          _
        // Predicated region
        $region21: #{tpu_custom_call.1} parent=11 // pred_check
          %p203 = pneg %p136
        $region22: #{tpu_custom_call.1} parent=11 // pred_check_branch
          %205 = sbr.rel (%p203) target = $region24
        $region23: #{tpu_custom_call.1} parent=11 // pred_region
          %s207 = ssub.s32 1024, 1024
          %208 = vsyncadd [#allocation9], %s207
          %s209 = sshll.u32 [#allocation10], 4
          %s210 = int_to_ptr.vmem [resolvable:$true] %s209
          %215 = dma.hbm_to_vmem [thread:$0]  %s4, 1024, %s210, [#allocation9], 64, 64, 4
        $region24: #{tpu_custom_call.1} parent=11 // pred_fallthru
          _
      $region12: #{tpu_custom_call.1} parent=5 // pred_fallthru
        _
      %p216 = scmp.lt.s32.totalorder %s21, 2
      // Predicated region
      $region25: #{tpu_custom_call.1} parent=5 // pred_check
        %p217 = pneg %p216
      $region26: #{tpu_custom_call.1} parent=5 // pred_check_branch
        %219 = sbr.rel (%p217) target = $region28
      $region27: #{tpu_custom_call.1} parent=5 // pred_region
        // Predicated region
        $region29: #{tpu_custom_call.1} parent=27 // pred_check
          %p220 = pneg %p41
        $region30: #{tpu_custom_call.1} parent=27 // pred_check_branch
          %222 = sbr.rel (%p220) target = $region32
        $region31: #{tpu_custom_call.1} parent=27 // pred_region
          %s223 = sand.u32 %s31, 1
          %s224 = scalar_lea.sflag [#allocation3], %s223
          %s225 = sand.u32 %s31, 1
          %s226 = smul.addr %s225, 8
          %s227 = scalar_lea.vmem [#allocation2], %s226
          %s229 = ssub.s32 128, 128
          %230 = vsyncadd %s224, %s229
          %s231 = smul.addr %s21, 128
          %s232 = scalar_lea.hbm %s0, %s231
          %s234 = sshll.u32 %s227, 4
          %s235 = int_to_ptr.vmem [resolvable:$true] %s234
          %237 = dma.hbm_to_vmem [thread:$0]  %s232, 128, %s235, %s224
        $region32: #{tpu_custom_call.1} parent=27 // pred_fallthru
          _
        // Predicated region
        $region33: #{tpu_custom_call.1} parent=27 // pred_check
          %p238 = pneg %p67
        $region34: #{tpu_custom_call.1} parent=27 // pred_check_branch
          %240 = sbr.rel (%p238) target = $region36
        $region35: #{tpu_custom_call.1} parent=27 // pred_region
          %s241 = sand.u32 %s21, 1
          %s242 = scalar_lea.sflag [#allocation6], %s241
          %s243 = sand.u32 %s57, 1
          %s244 = smul.addr %s243, 8
          %s245 = scalar_lea.vmem [#allocation5], %s244
          %s247 = ssub.s32 128, 128
          %248 = vsyncadd %s242, %s247
          %s249 = smul.addr %s21, 128
          %s250 = scalar_lea.hbm %s1, %s249
          %s252 = sshll.u32 %s245, 4
          %s253 = int_to_ptr.vmem [resolvable:$true] %s252
          %255 = dma.hbm_to_vmem [thread:$0]  %s250, 128, %s253, %s242
        $region36: #{tpu_custom_call.1} parent=27 // pred_fallthru
          _
      $region28: #{tpu_custom_call.1} parent=5 // pred_fallthru
        _
      %p256 = scmp.le.s32.totalorder 1, %s21
      %p257 = scmp.lt.s32.totalorder %s21, 3
      %p258 = pnand %p256, %p257
      %p259 = pneg %p258
      // Predicated region
      $region37: #{tpu_custom_call.1} parent=5 // pred_check
        _
      $region38: #{tpu_custom_call.1} parent=5 // pred_check_branch
        %261 = sbr.rel (%p258) target = $region40
      $region39: #{tpu_custom_call.1} parent=5 // pred_region
        %s262 = ssub.s32 %s21, 1
        %s263 = sand.u32 %s34, 1
        %s264 = scalar_lea.sflag [#allocation3], %s263
        %s265 = sand.u32 %s34, 1
        %s266 = smul.addr %s265, 8
        %s267 = scalar_lea.vmem [#allocation2], %s266
        // Predicated region
        $region41: #{tpu_custom_call.1} parent=39 // pred_check
          %p268 = pneg %p47
        $region42: #{tpu_custom_call.1} parent=39 // pred_check_branch
          %270 = sbr.rel (%p268) target = $region44
        $region43: #{tpu_custom_call.1} parent=39 // pred_region
          %271 = dma.done %s264, 128
        $region44: #{tpu_custom_call.1} parent=39 // pred_fallthru
          _
        %s272 = sand.u32 %s26, 1
        %s273 = scalar_lea.sflag [#allocation6], %s272
        %s274 = sand.u32 %s60, 1
        %s275 = smul.addr %s274, 8
        %s276 = scalar_lea.vmem [#allocation5], %s275
        // Predicated region
        $region45: #{tpu_custom_call.1} parent=39 // pred_check
          %p277 = pneg %p73
        $region46: #{tpu_custom_call.1} parent=39 // pred_check_branch
          %279 = sbr.rel (%p277) target = $region48
        $region47: #{tpu_custom_call.1} parent=39 // pred_region
          %280 = dma.done %s273, 128
        $region48: #{tpu_custom_call.1} parent=39 // pred_fallthru
          _
        // Predicated region
        $region49: #{tpu_custom_call.1} parent=39 // pred_check
          %p281 = pneg %p94
        $region50: #{tpu_custom_call.1} parent=39 // pred_check_branch
          %283 = sbr.rel (%p281) target = $region52
        $region51: #{tpu_custom_call.1} parent=39 // pred_region
          %284 = dma.done [#allocation6], 128
        $region52: #{tpu_custom_call.1} parent=39 // pred_fallthru
          _
        // Predicated region
        $region53: #{tpu_custom_call.1} parent=39 // pred_check
          %p285 = pneg %p115
        $region54: #{tpu_custom_call.1} parent=39 // pred_check_branch
          %287 = sbr.rel (%p285) target = $region56
        $region55: #{tpu_custom_call.1} parent=39 // pred_region
          %288 = dma.done [#allocation9], 256
        $region56: #{tpu_custom_call.1} parent=39 // pred_fallthru
          _
        // Predicated region
        $region57: #{tpu_custom_call.1} parent=39 // pred_check
          %p289 = pneg %p136
        $region58: #{tpu_custom_call.1} parent=39 // pred_check_branch
          %291 = sbr.rel (%p289) target = $region60
        $region59: #{tpu_custom_call.1} parent=39 // pred_region
          %292 = dma.done [#allocation9], 1024
        $region60: #{tpu_custom_call.1} parent=39 // pred_fallthru
          _
        %s293 = sand.u32 %s34, 1
        %s294 = scalar_lea.sflag [#allocation3], %s293
        %s295 = sand.u32 %s34, 1
        %s296 = smul.addr %s295, 8
        %s297 = scalar_lea.vmem [#allocation2], %s296
        %p298 = pneg %p47
        %p299 = pneg %p44
        %s300 = sand.u32 %s26, 1
        %s301 = scalar_lea.sflag [#allocation6], %s300
        %s302 = sand.u32 %s60, 1
        %s303 = smul.addr %s302, 8
        %s304 = scalar_lea.vmem [#allocation5], %s303
        %p305 = pneg %p73
        %p306 = pneg %p70
        %p307 = pneg %p94
        %p308 = pneg %p91
        %p309 = pneg %p115
        %p310 = pneg %p112
        %p311 = pneg %p136
        %p312 = pneg %p133
        %p313 = pneg %p162
        %p314 = pneg %p159
        %s315 = sand.u32 %s149, 1
        %s316 = scalar_lea.sflag [#allocation4], %s315
        %s317 = sand.u32 %s149, 1
        %s318 = smul.addr %s317, 8
        %s319 = scalar_lea.vmem [#allocation11], %s318
        %v321 = vld [vmem:[%s267] sm:$0xff]
        %v322 = vpack.c.bf16 %v321, %v321
        %v323 = vld [vmem:[#allocation7] sm:$0xf]
        %v324 = vld [vmem:[#allocation7 + $0x4] sm:$0xf]
        %v325 = vld [vmem:[%s276] sm:$0xff]
        %v326 = vpack.c.bf16 %v325, %v325
        %v327 = vld [vmem:[#allocation8] sm:$0xf]
        %v328 = vld [vmem:[#allocation8 + $0x4] sm:$0xf]
        %v329 = vld [vmem:[#allocation8 + $0x8] sm:$0xf]
        %v330 = vld [vmem:[#allocation8 + $0xc] sm:$0xf]
        %v335 = vunpack.c.l.b16 %v327
        %v336 = vunpack.c.l.b16 %v328
        %v337 = vunpack.c.l.b16 %v329
        %v338 = vunpack.c.l.b16 %v330
        %v339 = vpack.c.b16 %v336, %v335
        %v340 = vpack.c.b16 %v338, %v337
        %vm343 = vcmask 261120
        %v345 = vsel %vm343, %v326, 0
        %347 = vmatprep.subr.bf16.mxu0 0
        %348 = vmatpush1.bf16.msra.mxu0 %v339
        %349 = vmatprep.subr.bf16.mxu0 0
        %350 = vmatpush1.bf16.msra.mxu0 %v340
        %351 = vmatprep.subr.bf16.mxu0 0
        %352 = vmatpush1.bf16.msra.mxu0 0
        %353 = vmatprep.subr.bf16.mxu0 0
        %354 = vmatpush1.bf16.msra.mxu0 0
        %355 = vmatprep.subr.bf16.mxu0 0
        %356 = vmatpush1.bf16.msra.mxu0 0
        %357 = vmatprep.subr.bf16.mxu0 0
        %358 = vmatpush1.bf16.msra.mxu0 0
        %359 = vmatprep.subr.bf16.mxu0 0
        %360 = vmatpush1.bf16.msra.mxu0 0
        %361 = vmatprep.subr.bf16.mxu0 0
        %362 = vmatpush1.bf16.msra.mxu0 0
        %363 = vmatprep.subr.bf16.mxu0 0
        %364 = vmatpush1.bf16.msra.mxu0 0
        %365 = vmatprep.subr.bf16.mxu0 0
        %366 = vmatpush1.bf16.msra.mxu0 0
        %367 = vmatprep.subr.bf16.mxu0 0
        %368 = vmatpush1.bf16.msra.mxu0 0
        %369 = vmatprep.subr.bf16.mxu0 0
        %370 = vmatpush1.bf16.msra.mxu0 0
        %371 = vmatprep.subr.bf16.mxu0 0
        %372 = vmatpush1.bf16.msra.mxu0 0
        %373 = vmatprep.subr.bf16.mxu0 0
        %374 = vmatpush1.bf16.msra.mxu0 0
        %375 = vmatprep.subr.bf16.mxu0 0
        %376 = vmatpush1.bf16.msra.mxu0 0
        %377 = vmatprep.subr.bf16.mxu0 0
        %378 = vmatpush1.bf16.msra.mxu0 0
        %379 = vmatprep.mubr.bf16.mxu0 0
        %380 = vmatmul.mubr.bf16.gmra.mrb[0].mxu0 %v345
        %v381 = vpop.f32.mrb[0].mxu0
        %v382 = vadd.f32 0.0, %v381
        %v383 = vpop.f32.mrb[0].mxu0
        %v384 = vpop.f32.mrb[0].mxu0
        %v385 = vpop.f32.mrb[0].mxu0
        %386 = vdwg.mxu0
        %v389 = vunpack.c.l.b16 %v323
        %v390 = vunpack.c.l.b16 %v324
        %v391 = vpack.c.b16 %v390, %v389
        %vm393 = vcmask 130048
        %v395 = vsel %vm393, %v322, 0
        %397 = vmatprep.subr.bf16.mxu0 0
        %398 = vmatpush1.bf16.msra.mxu0 %v391
        %399 = vmatprep.subr.bf16.mxu0 0
        %400 = vmatpush1.bf16.msra.mxu0 0
        %401 = vmatprep.subr.bf16.mxu0 0
        %402 = vmatpush1.bf16.msra.mxu0 0
        %403 = vmatprep.subr.bf16.mxu0 0
        %404 = vmatpush1.bf16.msra.mxu0 0
        %405 = vmatprep.subr.bf16.mxu0 0
        %406 = vmatpush1.bf16.msra.mxu0 0
        %407 = vmatprep.subr.bf16.mxu0 0
        %408 = vmatpush1.bf16.msra.mxu0 0
        %409 = vmatprep.subr.bf16.mxu0 0
        %410 = vmatpush1.bf16.msra.mxu0 0
        %411 = vmatprep.subr.bf16.mxu0 0
        %412 = vmatpush1.bf16.msra.mxu0 0
        %413 = vmatprep.subr.bf16.mxu0 0
        %414 = vmatpush1.bf16.msra.mxu0 0
        %415 = vmatprep.subr.bf16.mxu0 0
        %416 = vmatpush1.bf16.msra.mxu0 0
        %417 = vmatprep.subr.bf16.mxu0 0
        %418 = vmatpush1.bf16.msra.mxu0 0
        %419 = vmatprep.subr.bf16.mxu0 0
        %420 = vmatpush1.bf16.msra.mxu0 0
        %421 = vmatprep.subr.bf16.mxu0 0
        %422 = vmatpush1.bf16.msra.mxu0 0
        %423 = vmatprep.subr.bf16.mxu0 0
        %424 = vmatpush1.bf16.msra.mxu0 0
        %425 = vmatprep.subr.bf16.mxu0 0
        %426 = vmatpush1.bf16.msra.mxu0 0
        %427 = vmatprep.subr.bf16.mxu0 0
        %428 = vmatpush1.bf16.msra.mxu0 0
        %429 = vmatprep.mubr.bf16.mxu0 0
        %430 = vmatmul.mubr.bf16.gmra.mrb[0].mxu0 %v395
        %v431 = vpop.f32.mrb[0].mxu0
        %v432 = vadd.f32 %v382, %v431
        %v433 = vpop.f32.mrb[0].mxu0
        %v434 = vpop.f32.mrb[0].mxu0
        %v435 = vpop.f32.mrb[0].mxu0
        %436 = vdwg.mxu0
        %v437 = vxor.u32 %v432, 2147483648
        %v438 = vmul.f32 %v437, 1.442695
        %v439 = vpow.pop %v438
        %v440 = vadd.f32 %v439, 1.0
        %v441 = vrcp.pop %v440
        %v442 = vmul.f32 1.0, %v441
        %v443 = vmul.f32 %v432, %v442
        %v444 = vpack.c.bf16 %v443, %v443
        %v445 = vld [vmem:[#allocation10] sm:$0xf]
        %v446 = vld [vmem:[#allocation10 + $0x4] sm:$0xf]
        %v447 = vld [vmem:[#allocation10 + $0x8] sm:$0xf]
        %v448 = vld [vmem:[#allocation10 + $0xc] sm:$0xf]
        %v449 = vld [vmem:[#allocation10 + $0x10] sm:$0xf]
        %v450 = vld [vmem:[#allocation10 + $0x14] sm:$0xf]
        %v451 = vld [vmem:[#allocation10 + $0x18] sm:$0xf]
        %v452 = vld [vmem:[#allocation10 + $0x1c] sm:$0xf]
        %v453 = vld [vmem:[#allocation10 + $0x20] sm:$0xf]
        %v454 = vld [vmem:[#allocation10 + $0x24] sm:$0xf]
        %v455 = vld [vmem:[#allocation10 + $0x28] sm:$0xf]
        %v456 = vld [vmem:[#allocation10 + $0x2c] sm:$0xf]
        %v457 = vld [vmem:[#allocation10 + $0x30] sm:$0xf]
        %v458 = vld [vmem:[#allocation10 + $0x34] sm:$0xf]
        %v459 = vld [vmem:[#allocation10 + $0x38] sm:$0xf]
        %v460 = vld [vmem:[#allocation10 + $0x3c] sm:$0xf]
        %v477 = vunpack.c.l.b16 %v445
        %v478 = vunpack.c.l.b16 %v446
        %v479 = vunpack.c.l.b16 %v447
        %v480 = vunpack.c.l.b16 %v448
        %v481 = vunpack.c.l.b16 %v449
        %v482 = vunpack.c.l.b16 %v450
        %v483 = vunpack.c.l.b16 %v451
        %v484 = vunpack.c.l.b16 %v452
        %v485 = vunpack.c.l.b16 %v453
        %v486 = vunpack.c.l.b16 %v454
        %v487 = vunpack.c.l.b16 %v455
        %v488 = vunpack.c.l.b16 %v456
        %v489 = vunpack.c.l.b16 %v457
        %v490 = vunpack.c.l.b16 %v458
        %v491 = vunpack.c.l.b16 %v459
        %v492 = vunpack.c.l.b16 %v460
        %v493 = vpack.c.b16 %v478, %v477
        %v494 = vpack.c.b16 %v480, %v479
        %v495 = vpack.c.b16 %v482, %v481
        %v496 = vpack.c.b16 %v484, %v483
        %v497 = vpack.c.b16 %v486, %v485
        %v498 = vpack.c.b16 %v488, %v487
        %v499 = vpack.c.b16 %v490, %v489
        %v500 = vpack.c.b16 %v492, %v491
        %509 = vmatprep.subr.bf16.mxu0 0
        %510 = vmatpush1.bf16.msra.mxu0 %v493
        %511 = vmatprep.subr.bf16.mxu0 0
        %512 = vmatpush1.bf16.msra.mxu0 %v494
        %513 = vmatprep.subr.bf16.mxu0 0
        %514 = vmatpush1.bf16.msra.mxu0 %v495
        %515 = vmatprep.subr.bf16.mxu0 0
        %516 = vmatpush1.bf16.msra.mxu0 %v496
        %517 = vmatprep.subr.bf16.mxu0 0
        %518 = vmatpush1.bf16.msra.mxu0 %v497
        %519 = vmatprep.subr.bf16.mxu0 0
        %520 = vmatpush1.bf16.msra.mxu0 %v498
        %521 = vmatprep.subr.bf16.mxu0 0
        %522 = vmatpush1.bf16.msra.mxu0 %v499
        %523 = vmatprep.subr.bf16.mxu0 0
        %524 = vmatpush1.bf16.msra.mxu0 %v500
        %525 = vmatprep.subr.bf16.mxu0 0
        %526 = vmatpush1.bf16.msra.mxu0 0
        %527 = vmatprep.subr.bf16.mxu0 0
        %528 = vmatpush1.bf16.msra.mxu0 0
        %529 = vmatprep.subr.bf16.mxu0 0
        %530 = vmatpush1.bf16.msra.mxu0 0
        %531 = vmatprep.subr.bf16.mxu0 0
        %532 = vmatpush1.bf16.msra.mxu0 0
        %533 = vmatprep.subr.bf16.mxu0 0
        %534 = vmatpush1.bf16.msra.mxu0 0
        %535 = vmatprep.subr.bf16.mxu0 0
        %536 = vmatpush1.bf16.msra.mxu0 0
        %537 = vmatprep.subr.bf16.mxu0 0
        %538 = vmatpush1.bf16.msra.mxu0 0
        %539 = vmatprep.subr.bf16.mxu0 0
        %540 = vmatpush1.bf16.msra.mxu0 0
        %541 = vmatprep.mubr.bf16.mxu0 0
        %542 = vmatmul.mubr.bf16.gmra.mrb[0].mxu0 %v444
        %v543 = vpop.f32.mrb[0].mxu0
        %v544 = vadd.f32 0.0, %v543
        %v545 = vpop.f32.mrb[0].mxu0
        %v546 = vpop.f32.mrb[0].mxu0
        %v547 = vpop.f32.mrb[0].mxu0
        %548 = vdwg.mxu0
        %549 = vst [vmem:[%s319] sm:$0xff] %v544
        %s550 = sand.u32 %s149, 1
        %s551 = scalar_lea.sflag [#allocation4], %s550
        %s552 = sand.u32 %s149, 1
        %s553 = smul.addr %s552, 8
        %s554 = scalar_lea.vmem [#allocation11], %s553
        // Predicated region
        $region61: #{tpu_custom_call.1} parent=39 // pred_check
          %p555 = pneg %p159
        $region62: #{tpu_custom_call.1} parent=39 // pred_check_branch
          %557 = sbr.rel (%p555) target = $region64
        $region63: #{tpu_custom_call.1} parent=39 // pred_region
          %s559 = ssub.s32 128, 128
          %560 = vsyncadd %s551, %s559
          %s561 = smul.addr %s26, 128
          %s562 = scalar_lea.hbm %s5, %s561
          %s564 = sshll.u32 %s554, 4
          %s565 = int_to_ptr.vmem [resolvable:$true] %s564
          %567 = dma.vmem_to_hbm [thread:$0]  %s565, 128, %s562, %s551
        $region64: #{tpu_custom_call.1} parent=39 // pred_fallthru
          _
      $region40: #{tpu_custom_call.1} parent=5 // pred_fallthru
        _
      %p568 = scmp.le.s32.totalorder 2, %s21
      // Predicated region
      $region65: #{tpu_custom_call.1} parent=5 // pred_check
        %p569 = pneg %p568
      $region66: #{tpu_custom_call.1} parent=5 // pred_check_branch
        %571 = sbr.rel (%p569) target = $region68
      $region67: #{tpu_custom_call.1} parent=5 // pred_region
        %s572 = ssub.s32 %s21, 2
        // Predicated region
        $region69: #{tpu_custom_call.1} parent=67 // pred_check
          %p573 = pneg %p165
        $region70: #{tpu_custom_call.1} parent=67 // pred_check_branch
          %575 = sbr.rel (%p573) target = $region72
        $region71: #{tpu_custom_call.1} parent=67 // pred_region
          %s576 = sand.u32 %s150, 1
          %s577 = scalar_lea.sflag [#allocation4], %s576
          %s578 = sand.u32 %s150, 1
          %s579 = smul.addr %s578, 8
          %s580 = scalar_lea.vmem [#allocation11], %s579
          %581 = dma.done %s577, 128
        $region72: #{tpu_custom_call.1} parent=67 // pred_fallthru
          _
      $region68: #{tpu_custom_call.1} parent=5 // pred_fallthru
        _
    $region6: #{tpu_custom_call.1} parent=1 // loop_footer
      %s25 = sadd.s32 1, %s21
    $region7: #{tpu_custom_call.1} parent=1 // loop_footer_branch
      %20 = sbr.rel target = $region3
    $region8: #{tpu_custom_call.1} parent=1 // loop_exit
      _
    %582 = vsyncpa [#allocation3], 1
    %s583 = scalar_lea.sflag [#allocation3], 1
    %584 = vsyncpa %s583, 1
    %585 = vsyncpa [#allocation6], 1
    %s586 = scalar_lea.sflag [#allocation6], 1
    %587 = vsyncpa %s586, 1
    %588 = vsyncpa [#allocation9], 1
    %589 = vsyncpa [#allocation4], 1
    %s590 = scalar_lea.sflag [#allocation4], 1
    %591 = vsyncpa %s590, 1

</llo_original>
